<compile_context>
chip_gen: v7x
topology: tpu7x:2x2x1
jax: 0.10.0
libtpu: 0.0.40
codegen_flags: <defaults>
</compile_context>

<pallas_src>
import jax
import jax.numpy as jnp
from jax import lax
from jax.experimental import pallas as pl
from jax.experimental.pallas import tpu as pltpu


def _mlp_kernel(alpha_ref, x_ref, w1_ref, b1_ref, w2_ref, b2_ref, o_ref):
    # fc1: h = x @ W1^T + b1   ([B, indim] . [width, indim]^T -> [B, width])
    h = lax.dot_general(
        x_ref[...], w1_ref[...],
        dimension_numbers=(((1,), (1,)), ((), ())),
        preferred_element_type=jnp.float32,
    ) + b1_ref[...]

    # learnable activation: PReLU with a scalar learnable alpha (SMEM)
    alpha = alpha_ref[0]
    a = jnp.where(h > 0, h, alpha * h)

    # fc2: out = a @ W2^T + b2  ([B, width] . [outdim, width]^T -> [B, outdim])
    out = lax.dot_general(
        a, w2_ref[...],
        dimension_numbers=(((1,), (1,)), ((), ())),
        preferred_element_type=jnp.float32,
    ) + b2_ref[...]

    o_ref[...] = out.astype(o_ref.dtype)


def single_hidden_layer_nn(x, w1, b1, w2, b2, alpha):
    """Forward pass of SingleHiddenLayerWideNNWithLearnablePriorsAndActivation.

    x:  [batch, indim]   float32
    w1: [width, indim]   (torch Linear layout), b1: [width]
    w2: [outdim, width]  (torch Linear layout), b2: [outdim]
    alpha: scalar learnable-activation parameter (PReLU slope)
    returns [batch, outdim]
    """
    batch, indim = x.shape
    width = w1.shape[0]
    outdim = w2.shape[0]

    # 2-D biases (1, n) so the in-kernel add broadcasts over the batch rows.
    b1r = jnp.asarray(b1, jnp.float32).reshape(1, width)
    b2r = jnp.asarray(b2, jnp.float32).reshape(1, outdim)
    alpha_arr = jnp.asarray(alpha, jnp.float32).reshape(1)

    vmem = pl.BlockSpec(memory_space=pltpu.MemorySpace.VMEM)
    smem = pl.BlockSpec(memory_space=pltpu.MemorySpace.SMEM)

    return pl.pallas_call(
        _mlp_kernel,
        out_shape=jax.ShapeDtypeStruct((batch, outdim), x.dtype),
        in_specs=[smem, vmem, vmem, vmem, vmem, vmem],
        out_specs=vmem,
    )(alpha_arr, x, w1, b1r, w2, b2r)


def _reference(x, w1, b1, w2, b2, alpha):
    h = x @ w1.T + b1
    a = jnp.where(h > 0, h, alpha * h)
    return a @ w2.T + b2


if __name__ == "__main__":
    # Small shapes consistent with the module: wide hidden layer, tiny in/out.
    batch, indim, width, outdim = 8, 4, 512, 4

    key = jax.random.PRNGKey(0)
    kx, k1, kb1, k2, kb2 = jax.random.split(key, 5)

    # Deterministic torch-Linear-style init: U(-1/sqrt(fan_in), 1/sqrt(fan_in))
    lim1 = 1.0 / jnp.sqrt(indim)
    lim2 = 1.0 / jnp.sqrt(width)
    x = jax.random.normal(kx, (batch, indim), jnp.float32)
    w1 = jax.random.uniform(k1, (width, indim), jnp.float32, -lim1, lim1)
    b1 = jax.random.uniform(kb1, (width,), jnp.float32, -lim1, lim1)
    w2 = jax.random.uniform(k2, (outdim, width), jnp.float32, -lim2, lim2)
    b2 = jax.random.uniform(kb2, (outdim,), jnp.float32, -lim2, lim2)
    alpha = jnp.float32(0.25)   # learnable activation parameter (PReLU slope)

    out = single_hidden_layer_nn(x, w1, b1, w2, b2, alpha)
    out = jax.block_until_ready(out)

    ref = _reference(x, w1, b1, w2, b2, alpha)
    assert out.shape == (batch, outdim)
    assert jnp.allclose(out, ref, atol=1e-5, rtol=1e-5), "mismatch vs reference"

    print("KERNEL_OK")
</pallas_src>

<mosaic_0001>
module attributes {stable_mosaic.version = 11 : i64} {
  func.func @_mlp_kernel(%arg0: memref<1xf32, #tpu.memory_space<smem>>, %arg1: memref<8x4xf32, #tpu.memory_space<vmem>>, %arg2: memref<512x4xf32, #tpu.memory_space<vmem>>, %arg3: memref<1x512xf32, #tpu.memory_space<vmem>>, %arg4: memref<4x512xf32, #tpu.memory_space<vmem>>, %arg5: memref<1x4xf32, #tpu.memory_space<vmem>>, %arg6: memref<8x4xf32, #tpu.memory_space<vmem>>) attributes {dimension_semantics = [], scalar_prefetch = 0 : i64, scratch_operands = 0 : i64, tpu.core_type = #tpu.core_type<tc>} {
    %c0 = arith.constant 0 : index
    %c0_0 = arith.constant 0 : index
    %0 = vector.load %arg1[%c0, %c0_0] : memref<8x4xf32, #tpu.memory_space<vmem>>, vector<8x4xf32>
    %c0_1 = arith.constant 0 : index
    %c0_2 = arith.constant 0 : index
    %1 = vector.load %arg2[%c0_1, %c0_2] : memref<512x4xf32, #tpu.memory_space<vmem>>, vector<512x4xf32>
    %cst = arith.constant dense<0.000000e+00> : vector<8x512xf32>
    %2 = tpu.matmul %0, %1, %cst {dimension_numbers = #tpu.dot_dimension_numbers<[1], [1], [0], [0], [0, 0, 1, 0], [], []>} : vector<8x4xf32>, vector<512x4xf32>, vector<8x512xf32> -> vector<8x512xf32>
    %c0_3 = arith.constant 0 : index
    %c0_4 = arith.constant 0 : index
    %3 = vector.load %arg3[%c0_3, %c0_4] : memref<1x512xf32, #tpu.memory_space<vmem>>, vector<1x512xf32>
    %4 = vector.broadcast %3 : vector<1x512xf32> to vector<8x512xf32>
    %5 = arith.addf %2, %4 : vector<8x512xf32>
    %c0_5 = arith.constant 0 : index
    %6 = memref.load %arg0[%c0_5] : memref<1xf32, #tpu.memory_space<smem>>
    %cst_6 = arith.constant 0.000000e+00 : f32
    %7 = vector.broadcast %cst_6 : f32 to vector<8x512xf32>
    %8 = arith.cmpf ogt, %5, %7 : vector<8x512xf32>
    %9 = vector.broadcast %6 : f32 to vector<8x512xf32>
    %10 = arith.mulf %9, %5 : vector<8x512xf32>
    %11 = arith.select %8, %5, %10 : vector<8x512xi1>, vector<8x512xf32>
    %c0_7 = arith.constant 0 : index
    %c0_8 = arith.constant 0 : index
    %12 = vector.load %arg4[%c0_7, %c0_8] : memref<4x512xf32, #tpu.memory_space<vmem>>, vector<4x512xf32>
    %cst_9 = arith.constant dense<0.000000e+00> : vector<8x4xf32>
    %13 = tpu.matmul %11, %12, %cst_9 {dimension_numbers = #tpu.dot_dimension_numbers<[1], [1], [0], [0], [0, 0, 1, 0], [], []>} : vector<8x512xf32>, vector<4x512xf32>, vector<8x4xf32> -> vector<8x4xf32>
    %c0_10 = arith.constant 0 : index
    %c0_11 = arith.constant 0 : index
    %14 = vector.load %arg5[%c0_10, %c0_11] : memref<1x4xf32, #tpu.memory_space<vmem>>, vector<1x4xf32>
    %15 = vector.broadcast %14 : vector<1x4xf32> to vector<8x4xf32>
    %16 = arith.addf %13, %15 : vector<8x4xf32>
    %c0_12 = arith.constant 0 : index
    %c0_13 = arith.constant 0 : index
    %17 = vector.load %arg6[%c0_12, %c0_13] : memref<8x4xf32, #tpu.memory_space<vmem>>, vector<8x4xf32>
    tpu.vector_store %arg6[%c0_12, %c0_13], %16 {strides = array<i32>} : memref<8x4xf32, #tpu.memory_space<vmem>>, vector<8x4xf32>,
    return
  }
}

</mosaic_0001>

<llo_original>
// kernel: tpu_custom_call.1
$region0: #{tpu_custom_call.1}
  #allocation0 [shape = 'u32[]', space=smem, size = 0x4, offset = 0x4, fixed_abs, tag = 'smem constant byte address 0x4 - core index']
  #allocation1 [shape = 'u32[144,128]{1,0:T(1,128)}', space=vmem, size = 0x12000, scoped, tag = 'internal scratch']
  #allocation2 [shape = 'f32[1]{0:T(128)S(6)}', space=smem, size = 0x200, scoped, tag = 'scoped memory for tpu_custom_call.1']
  %s0 = inlined_call_operand.<no memory space> [shape: f32[1], index: 0, kind: input, shape index: {}]
  %s1 = inlined_call_operand.vmem [shape: f32[8,4], index: 1, kind: input, shape index: {}]
  %s2 = inlined_call_operand.vmem [shape: f32[512,4], index: 2, kind: input, shape index: {}]
  %s3 = inlined_call_operand.vmem [shape: f32[1,512], index: 3, kind: input, shape index: {}]
  %s4 = inlined_call_operand.vmem [shape: f32[4,512], index: 4, kind: input, shape index: {}]
  %s5 = inlined_call_operand.vmem [shape: f32[1,4], index: 5, kind: input, shape index: {}]
  %s6 = inlined_call_operand.vmem [shape: f32[8,4], index: 6, kind: output, shape index: {}]
  %s7 = sld [smem:[#allocation0]]
  $region34: #{tpu_custom_call.1} parent=0
    _
  %s9 = ssub.s32 1, %s7
  %s10 = scalar_select 0, %s9, %s7
  %11 = sst [smem:[#allocation2]] %s0
  // Predicated region
  $region2: #{tpu_custom_call.1} parent=0 // pred_check
    _
  $region3: #{tpu_custom_call.1} parent=0 // pred_check_branch
    %13 = sbr.rel (0) target = $region5
  $region4: #{tpu_custom_call.1} parent=0 // pred_region
    _
  $region5: #{tpu_custom_call.1} parent=0 // pred_fallthru
    _
  // Predicated region
  $region6: #{tpu_custom_call.1} parent=0 // pred_check
    _
  $region7: #{tpu_custom_call.1} parent=0 // pred_check_branch
    %15 = sbr.rel (0) target = $region9
  $region8: #{tpu_custom_call.1} parent=0 // pred_region
    _
  $region9: #{tpu_custom_call.1} parent=0 // pred_fallthru
    _
  // Predicated region
  $region10: #{tpu_custom_call.1} parent=0 // pred_check
    _
  $region11: #{tpu_custom_call.1} parent=0 // pred_check_branch
    %17 = sbr.rel (0) target = $region13
  $region12: #{tpu_custom_call.1} parent=0 // pred_region
    _
  $region13: #{tpu_custom_call.1} parent=0 // pred_fallthru
    _
  // Predicated region
  $region14: #{tpu_custom_call.1} parent=0 // pred_check
    _
  $region15: #{tpu_custom_call.1} parent=0 // pred_check_branch
    %19 = sbr.rel (0) target = $region17
  $region16: #{tpu_custom_call.1} parent=0 // pred_region
    _
  $region17: #{tpu_custom_call.1} parent=0 // pred_fallthru
    _
  // Predicated region
  $region18: #{tpu_custom_call.1} parent=0 // pred_check
    _
  $region19: #{tpu_custom_call.1} parent=0 // pred_check_branch
    %21 = sbr.rel (0) target = $region21
  $region20: #{tpu_custom_call.1} parent=0 // pred_region
    _
  $region21: #{tpu_custom_call.1} parent=0 // pred_fallthru
    _
  // Predicated region
  $region22: #{tpu_custom_call.1} parent=0 // pred_check
    _
  $region23: #{tpu_custom_call.1} parent=0 // pred_check_branch
    %23 = sbr.rel (0) target = $region25
  $region24: #{tpu_custom_call.1} parent=0 // pred_region
    _
  $region25: #{tpu_custom_call.1} parent=0 // pred_fallthru
    _
  %v24 = vld [vmem:[%s1] sm:$0xff]
  %v25 = vld [vmem:[%s2] sm:$0xff]
  %v26 = vld [vmem:[%s2 + $0x8] sm:$0xff]
  %v27 = vld [vmem:[%s2 + $0x10] sm:$0xff]
  %v28 = vld [vmem:[%s2 + $0x18] sm:$0xff]
  %v29 = vld [vmem:[%s2 + $0x20] sm:$0xff]
  %v30 = vld [vmem:[%s2 + $0x28] sm:$0xff]
  %v31 = vld [vmem:[%s2 + $0x30] sm:$0xff]
  %v32 = vld [vmem:[%s2 + $0x38] sm:$0xff]
  %v33 = vld [vmem:[%s2 + $0x40] sm:$0xff]
  %v34 = vld [vmem:[%s2 + $0x48] sm:$0xff]
  %v35 = vld [vmem:[%s2 + $0x50] sm:$0xff]
  %v36 = vld [vmem:[%s2 + $0x58] sm:$0xff]
  %v37 = vld [vmem:[%s2 + $0x60] sm:$0xff]
  %v38 = vld [vmem:[%s2 + $0x68] sm:$0xff]
  %v39 = vld [vmem:[%s2 + $0x70] sm:$0xff]
  %v40 = vld [vmem:[%s2 + $0x78] sm:$0xff]
  %v41 = vld [vmem:[%s2 + $0x80] sm:$0xff]
  %v42 = vld [vmem:[%s2 + $0x88] sm:$0xff]
  %v43 = vld [vmem:[%s2 + $0x90] sm:$0xff]
  %v44 = vld [vmem:[%s2 + $0x98] sm:$0xff]
  %v45 = vld [vmem:[%s2 + $0xa0] sm:$0xff]
  %v46 = vld [vmem:[%s2 + $0xa8] sm:$0xff]
  %v47 = vld [vmem:[%s2 + $0xb0] sm:$0xff]
  %v48 = vld [vmem:[%s2 + $0xb8] sm:$0xff]
  %v49 = vld [vmem:[%s2 + $0xc0] sm:$0xff]
  %v50 = vld [vmem:[%s2 + $0xc8] sm:$0xff]
  %v51 = vld [vmem:[%s2 + $0xd0] sm:$0xff]
  %v52 = vld [vmem:[%s2 + $0xd8] sm:$0xff]
  %v53 = vld [vmem:[%s2 + $0xe0] sm:$0xff]
  %v54 = vld [vmem:[%s2 + $0xe8] sm:$0xff]
  %v55 = vld [vmem:[%s2 + $0xf0] sm:$0xff]
  %v56 = vld [vmem:[%s2 + $0xf8] sm:$0xff]
  %v57 = vld [vmem:[%s2 + $0x100] sm:$0xff]
  %v58 = vld [vmem:[%s2 + $0x108] sm:$0xff]
  %v59 = vld [vmem:[%s2 + $0x110] sm:$0xff]
  %v60 = vld [vmem:[%s2 + $0x118] sm:$0xff]
  %v61 = vld [vmem:[%s2 + $0x120] sm:$0xff]
  %v62 = vld [vmem:[%s2 + $0x128] sm:$0xff]
  %v63 = vld [vmem:[%s2 + $0x130] sm:$0xff]
  %v64 = vld [vmem:[%s2 + $0x138] sm:$0xff]
  %v65 = vld [vmem:[%s2 + $0x140] sm:$0xff]
  %v66 = vld [vmem:[%s2 + $0x148] sm:$0xff]
  %v67 = vld [vmem:[%s2 + $0x150] sm:$0xff]
  %v68 = vld [vmem:[%s2 + $0x158] sm:$0xff]
  %v69 = vld [vmem:[%s2 + $0x160] sm:$0xff]
  %v70 = vld [vmem:[%s2 + $0x168] sm:$0xff]
  %v71 = vld [vmem:[%s2 + $0x170] sm:$0xff]
  %v72 = vld [vmem:[%s2 + $0x178] sm:$0xff]
  %v73 = vld [vmem:[%s2 + $0x180] sm:$0xff]
  %v74 = vld [vmem:[%s2 + $0x188] sm:$0xff]
  %v75 = vld [vmem:[%s2 + $0x190] sm:$0xff]
  %v76 = vld [vmem:[%s2 + $0x198] sm:$0xff]
  %v77 = vld [vmem:[%s2 + $0x1a0] sm:$0xff]
  %v78 = vld [vmem:[%s2 + $0x1a8] sm:$0xff]
  %v79 = vld [vmem:[%s2 + $0x1b0] sm:$0xff]
  %v80 = vld [vmem:[%s2 + $0x1b8] sm:$0xff]
  %v81 = vld [vmem:[%s2 + $0x1c0] sm:$0xff]
  %v82 = vld [vmem:[%s2 + $0x1c8] sm:$0xff]
  %v83 = vld [vmem:[%s2 + $0x1d0] sm:$0xff]
  %v84 = vld [vmem:[%s2 + $0x1d8] sm:$0xff]
  %v85 = vld [vmem:[%s2 + $0x1e0] sm:$0xff]
  %v86 = vld [vmem:[%s2 + $0x1e8] sm:$0xff]
  %v87 = vld [vmem:[%s2 + $0x1f0] sm:$0xff]
  %v88 = vld [vmem:[%s2 + $0x1f8] sm:$0xff]
  %v89 = vld [vmem:[%s3] sm:$0xf]
  %v91 = vlaneseq
  %v92 = vshrl.u32 %v91, 7
  %v93 = vsub.s32 0, %v92
  %v94 = vrot.slane %v89, %v93
  %v95 = vlaneseq
  %v96 = vshrl.u32 %v95, 7
  %v97 = vsub.s32 1, %v96
  %v98 = vrot.slane %v89, %v97
  %v99 = vlaneseq
  %v100 = vshrl.u32 %v99, 7
  %v101 = vsub.s32 2, %v100
  %v102 = vrot.slane %v89, %v101
  %v103 = vlaneseq
  %v104 = vshrl.u32 %v103, 7
  %v105 = vsub.s32 3, %v104
  %v106 = vrot.slane %v89, %v105
  %vm111 = vcmask 31744
  %v113 = vsel %vm111, %v24, 0
  %v116 = vsel %vm111, %v25, 0
  %v119 = vsel %vm111, %v26, 0
  %v122 = vsel %vm111, %v27, 0
  %v125 = vsel %vm111, %v28, 0
  %v128 = vsel %vm111, %v29, 0
  %v131 = vsel %vm111, %v30, 0
  %v134 = vsel %vm111, %v31, 0
  %v137 = vsel %vm111, %v32, 0
  %v140 = vsel %vm111, %v33, 0
  %v143 = vsel %vm111, %v34, 0
  %v146 = vsel %vm111, %v35, 0
  %v149 = vsel %vm111, %v36, 0
  %v152 = vsel %vm111, %v37, 0
  %v155 = vsel %vm111, %v38, 0
  %v158 = vsel %vm111, %v39, 0
  %v161 = vsel %vm111, %v40, 0
  %v164 = vsel %vm111, %v41, 0
  %v167 = vsel %vm111, %v42, 0
  %v170 = vsel %vm111, %v43, 0
  %v173 = vsel %vm111, %v44, 0
  %v176 = vsel %vm111, %v45, 0
  %v179 = vsel %vm111, %v46, 0
  %v182 = vsel %vm111, %v47, 0
  %v185 = vsel %vm111, %v48, 0
  %v188 = vsel %vm111, %v49, 0
  %v191 = vsel %vm111, %v50, 0
  %v194 = vsel %vm111, %v51, 0
  %v197 = vsel %vm111, %v52, 0
  %v200 = vsel %vm111, %v53, 0
  %v203 = vsel %vm111, %v54, 0
  %v206 = vsel %vm111, %v55, 0
  %v209 = vsel %vm111, %v56, 0
  %v212 = vsel %vm111, %v57, 0
  %v215 = vsel %vm111, %v58, 0
  %v218 = vsel %vm111, %v59, 0
  %v221 = vsel %vm111, %v60, 0
  %v224 = vsel %vm111, %v61, 0
  %v227 = vsel %vm111, %v62, 0
  %v230 = vsel %vm111, %v63, 0
  %v233 = vsel %vm111, %v64, 0
  %v236 = vsel %vm111, %v65, 0
  %v239 = vsel %vm111, %v66, 0
  %v242 = vsel %vm111, %v67, 0
  %v245 = vsel %vm111, %v68, 0
  %v248 = vsel %vm111, %v69, 0
  %v251 = vsel %vm111, %v70, 0
  %v254 = vsel %vm111, %v71, 0
  %v257 = vsel %vm111, %v72, 0
  %v260 = vsel %vm111, %v73, 0
  %v263 = vsel %vm111, %v74, 0
  %v266 = vsel %vm111, %v75, 0
  %v269 = vsel %vm111, %v76, 0
  %v272 = vsel %vm111, %v77, 0
  %v275 = vsel %vm111, %v78, 0
  %v278 = vsel %vm111, %v79, 0
  %v281 = vsel %vm111, %v80, 0
  %v284 = vsel %vm111, %v81, 0
  %v287 = vsel %vm111, %v82, 0
  %v290 = vsel %vm111, %v83, 0
  %v293 = vsel %vm111, %v84, 0
  %v296 = vsel %vm111, %v85, 0
  %v299 = vsel %vm111, %v86, 0
  %v302 = vsel %vm111, %v87, 0
  %v305 = vsel %vm111, %v88, 0
  %307 = vmatprep.subr.mxu0 0.0
  %308 = vmatpush1.xpose.msra.mxu0 %v116
  %309 = vmatprep.subr.mxu0 0.0
  %310 = vmatpush1.xpose.msra.mxu0 %v119
  %311 = vmatprep.subr.mxu0 0.0
  %312 = vmatpush1.xpose.msra.mxu0 %v122
  %313 = vmatprep.subr.mxu0 0.0
  %314 = vmatpush1.xpose.msra.mxu0 %v125
  %315 = vmatprep.subr.mxu0 0.0
  %316 = vmatpush1.xpose.msra.mxu0 %v128
  %317 = vmatprep.subr.mxu0 0.0
  %318 = vmatpush1.xpose.msra.mxu0 %v131
  %319 = vmatprep.subr.mxu0 0.0
  %320 = vmatpush1.xpose.msra.mxu0 %v134
  %321 = vmatprep.subr.mxu0 0.0
  %322 = vmatpush1.xpose.msra.mxu0 %v137
  %323 = vmatprep.subr.mxu0 0.0
  %324 = vmatpush1.xpose.msra.mxu0 %v140
  %325 = vmatprep.subr.mxu0 0.0
  %326 = vmatpush1.xpose.msra.mxu0 %v143
  %327 = vmatprep.subr.mxu0 0.0
  %328 = vmatpush1.xpose.msra.mxu0 %v146
  %329 = vmatprep.subr.mxu0 0.0
  %330 = vmatpush1.xpose.msra.mxu0 %v149
  %331 = vmatprep.subr.mxu0 0.0
  %332 = vmatpush1.xpose.msra.mxu0 %v152
  %333 = vmatprep.subr.mxu0 0.0
  %334 = vmatpush1.xpose.msra.mxu0 %v155
  %335 = vmatprep.subr.mxu0 0.0
  %336 = vmatpush1.xpose.msra.mxu0 %v158
  %337 = vmatprep.subr.mxu0 0.0
  %338 = vmatpush1.xpose.msra.mxu0 %v161
  %339 = vmatprep.subr.mxu0 0.0
  %340 = vmatpush1.xpose.msra.mxu0 %v164
  %341 = vmatprep.subr.mxu0 0.0
  %342 = vmatpush1.xpose.msra.mxu0 %v167
  %343 = vmatprep.subr.mxu0 0.0
  %344 = vmatpush1.xpose.msra.mxu0 %v170
  %345 = vmatprep.subr.mxu0 0.0
  %346 = vmatpush1.xpose.msra.mxu0 %v173
  %347 = vmatprep.subr.mxu0 0.0
  %348 = vmatpush1.xpose.msra.mxu0 %v176
  %349 = vmatprep.subr.mxu0 0.0
  %350 = vmatpush1.xpose.msra.mxu0 %v179
  %351 = vmatprep.subr.mxu0 0.0
  %352 = vmatpush1.xpose.msra.mxu0 %v182
  %353 = vmatprep.subr.mxu0 0.0
  %354 = vmatpush1.xpose.msra.mxu0 %v185
  %355 = vmatprep.subr.mxu0 0.0
  %356 = vmatpush1.xpose.msra.mxu0 %v188
  %357 = vmatprep.subr.mxu0 0.0
  %358 = vmatpush1.xpose.msra.mxu0 %v191
  %359 = vmatprep.subr.mxu0 0.0
  %360 = vmatpush1.xpose.msra.mxu0 %v194
  %361 = vmatprep.subr.mxu0 0.0
  %362 = vmatpush1.xpose.msra.mxu0 %v197
  %363 = vmatprep.subr.mxu0 0.0
  %364 = vmatpush1.xpose.msra.mxu0 %v200
  %365 = vmatprep.subr.mxu0 0.0
  %366 = vmatpush1.xpose.msra.mxu0 %v203
  %367 = vmatprep.subr.mxu0 0.0
  %368 = vmatpush1.xpose.msra.mxu0 %v206
  %369 = vmatprep.subr.mxu0 0.0
  %370 = vmatpush1.xpose.msra.mxu0 %v209
  %371 = vmatprep.mubr.f32.mxu0 0.0
  %372 = vmatmul.mubr.f32.gmra.mrb[0].mxu0 %v113
  %v373 = vpop.f32.mrb[0].mxu0
  %v374 = vadd.f32 %v94, %v373
  %v375 = vpop.f32.mrb[0].mxu0
  %v376 = vadd.f32 %v98, %v375
  %377 = vdwg.mxu0
  %378 = vmatprep.subr.mxu0 0.0
  %379 = vmatpush1.xpose.msra.mxu0 %v212
  %380 = vmatprep.subr.mxu0 0.0
  %381 = vmatpush1.xpose.msra.mxu0 %v215
  %382 = vmatprep.subr.mxu0 0.0
  %383 = vmatpush1.xpose.msra.mxu0 %v218
  %384 = vmatprep.subr.mxu0 0.0
  %385 = vmatpush1.xpose.msra.mxu0 %v221
  %386 = vmatprep.subr.mxu0 0.0
  %387 = vmatpush1.xpose.msra.mxu0 %v224
  %388 = vmatprep.subr.mxu0 0.0
  %389 = vmatpush1.xpose.msra.mxu0 %v227
  %390 = vmatprep.subr.mxu0 0.0
  %391 = vmatpush1.xpose.msra.mxu0 %v230
  %392 = vmatprep.subr.mxu0 0.0
  %393 = vmatpush1.xpose.msra.mxu0 %v233
  %394 = vmatprep.subr.mxu0 0.0
  %395 = vmatpush1.xpose.msra.mxu0 %v236
  %396 = vmatprep.subr.mxu0 0.0
  %397 = vmatpush1.xpose.msra.mxu0 %v239
  %398 = vmatprep.subr.mxu0 0.0
  %399 = vmatpush1.xpose.msra.mxu0 %v242
  %400 = vmatprep.subr.mxu0 0.0
  %401 = vmatpush1.xpose.msra.mxu0 %v245
  %402 = vmatprep.subr.mxu0 0.0
  %403 = vmatpush1.xpose.msra.mxu0 %v248
  %404 = vmatprep.subr.mxu0 0.0
  %405 = vmatpush1.xpose.msra.mxu0 %v251
  %406 = vmatprep.subr.mxu0 0.0
  %407 = vmatpush1.xpose.msra.mxu0 %v254
  %408 = vmatprep.subr.mxu0 0.0
  %409 = vmatpush1.xpose.msra.mxu0 %v257
  %410 = vmatprep.subr.mxu0 0.0
  %411 = vmatpush1.xpose.msra.mxu0 %v260
  %412 = vmatprep.subr.mxu0 0.0
  %413 = vmatpush1.xpose.msra.mxu0 %v263
  %414 = vmatprep.subr.mxu0 0.0
  %415 = vmatpush1.xpose.msra.mxu0 %v266
  %416 = vmatprep.subr.mxu0 0.0
  %417 = vmatpush1.xpose.msra.mxu0 %v269
  %418 = vmatprep.subr.mxu0 0.0
  %419 = vmatpush1.xpose.msra.mxu0 %v272
  %420 = vmatprep.subr.mxu0 0.0
  %421 = vmatpush1.xpose.msra.mxu0 %v275
  %422 = vmatprep.subr.mxu0 0.0
  %423 = vmatpush1.xpose.msra.mxu0 %v278
  %424 = vmatprep.subr.mxu0 0.0
  %425 = vmatpush1.xpose.msra.mxu0 %v281
  %426 = vmatprep.subr.mxu0 0.0
  %427 = vmatpush1.xpose.msra.mxu0 %v284
  %428 = vmatprep.subr.mxu0 0.0
  %429 = vmatpush1.xpose.msra.mxu0 %v287
  %430 = vmatprep.subr.mxu0 0.0
  %431 = vmatpush1.xpose.msra.mxu0 %v290
  %432 = vmatprep.subr.mxu0 0.0
  %433 = vmatpush1.xpose.msra.mxu0 %v293
  %434 = vmatprep.subr.mxu0 0.0
  %435 = vmatpush1.xpose.msra.mxu0 %v296
  %436 = vmatprep.subr.mxu0 0.0
  %437 = vmatpush1.xpose.msra.mxu0 %v299
  %438 = vmatprep.subr.mxu0 0.0
  %439 = vmatpush1.xpose.msra.mxu0 %v302
  %440 = vmatprep.subr.mxu0 0.0
  %441 = vmatpush1.xpose.msra.mxu0 %v305
  %442 = vmatprep.mubr.f32.mxu0 0.0
  %443 = vmatmul.mubr.f32.gmra.mrb[0].mxu0 %v113
  %v444 = vpop.f32.mrb[0].mxu0
  %v445 = vadd.f32 %v102, %v444
  %v446 = vpop.f32.mrb[0].mxu0
  %v447 = vadd.f32 %v106, %v446
  %448 = vdwg.mxu0
  %s449 = sld [smem:[#allocation2]]
  %vm450 = vcmp.gt.f32.partialorder %v374, 0.0
  %vm451 = vcmp.gt.f32.partialorder %v376, 0.0
  %vm452 = vcmp.gt.f32.partialorder %v445, 0.0
  %vm453 = vcmp.gt.f32.partialorder %v447, 0.0
  %v454 = vstv %s449
  %v455 = vmul.f32 %v454, %v374
  %v456 = vmul.f32 %v454, %v376
  %v457 = vmul.f32 %v454, %v445
  %v458 = vmul.f32 %v454, %v447
  %v459 = vsel %vm450, %v374, %v455
  %v460 = vsel %vm451, %v376, %v456
  %v461 = vsel %vm452, %v445, %v457
  %v462 = vsel %vm453, %v447, %v458
  %v463 = vld [vmem:[%s4] sm:$0xff]
  %v464 = vld [vmem:[%s4 + $0x8] sm:$0xff]
  %v465 = vld [vmem:[%s5] sm:$0x1]
  %v467 = vlaneseq
  %v468 = vshrl.u32 %v467, 7
  %v469 = vsub.s32 0, %v468
  %v470 = vrot.slane %v465, %v469
  %v474 = vcombine.high %v463, %v463
  %v475 = vcombine.high %v464, %v464
  %478 = vmatprep.subr.mxu0 %v474
  %479 = vmatpush1.xpose.msra.mxu0 %v463
  %480 = vmatprep.subr.mxu0 0.0
  %481 = vmatpush1.xpose.msra.mxu0 0.0
  %482 = vmatprep.subr.mxu0 0.0
  %483 = vmatpush1.xpose.msra.mxu0 0.0
  %484 = vmatprep.subr.mxu0 0.0
  %485 = vmatpush1.xpose.msra.mxu0 0.0
  %486 = vmatprep.subr.mxu0 0.0
  %487 = vmatpush1.xpose.msra.mxu0 0.0
  %488 = vmatprep.subr.mxu0 0.0
  %489 = vmatpush1.xpose.msra.mxu0 0.0
  %490 = vmatprep.subr.mxu0 0.0
  %491 = vmatpush1.xpose.msra.mxu0 0.0
  %492 = vmatprep.subr.mxu0 0.0
  %493 = vmatpush1.xpose.msra.mxu0 0.0
  %494 = vmatprep.subr.mxu0 0.0
  %495 = vmatpush1.xpose.msra.mxu0 0.0
  %496 = vmatprep.subr.mxu0 0.0
  %497 = vmatpush1.xpose.msra.mxu0 0.0
  %498 = vmatprep.subr.mxu0 0.0
  %499 = vmatpush1.xpose.msra.mxu0 0.0
  %500 = vmatprep.subr.mxu0 0.0
  %501 = vmatpush1.xpose.msra.mxu0 0.0
  %502 = vmatprep.subr.mxu0 0.0
  %503 = vmatpush1.xpose.msra.mxu0 0.0
  %504 = vmatprep.subr.mxu0 0.0
  %505 = vmatpush1.xpose.msra.mxu0 0.0
  %506 = vmatprep.subr.mxu0 0.0
  %507 = vmatpush1.xpose.msra.mxu0 0.0
  %508 = vmatprep.subr.mxu0 0.0
  %509 = vmatpush1.xpose.msra.mxu0 0.0
  %510 = vmatprep.subr.mxu0 0.0
  %511 = vmatpush1.xpose.msra.mxu0 0.0
  %512 = vmatprep.subr.mxu0 0.0
  %513 = vmatpush1.xpose.msra.mxu0 0.0
  %514 = vmatprep.subr.mxu0 0.0
  %515 = vmatpush1.xpose.msra.mxu0 0.0
  %516 = vmatprep.subr.mxu0 0.0
  %517 = vmatpush1.xpose.msra.mxu0 0.0
  %518 = vmatprep.subr.mxu0 0.0
  %519 = vmatpush1.xpose.msra.mxu0 0.0
  %520 = vmatprep.subr.mxu0 0.0
  %521 = vmatpush1.xpose.msra.mxu0 0.0
  %522 = vmatprep.subr.mxu0 0.0
  %523 = vmatpush1.xpose.msra.mxu0 0.0
  %524 = vmatprep.subr.mxu0 0.0
  %525 = vmatpush1.xpose.msra.mxu0 0.0
  %526 = vmatprep.subr.mxu0 0.0
  %527 = vmatpush1.xpose.msra.mxu0 0.0
  %528 = vmatprep.subr.mxu0 0.0
  %529 = vmatpush1.xpose.msra.mxu0 0.0
  %530 = vmatprep.subr.mxu0 0.0
  %531 = vmatpush1.xpose.msra.mxu0 0.0
  %532 = vmatprep.subr.mxu0 0.0
  %533 = vmatpush1.xpose.msra.mxu0 0.0
  %534 = vmatprep.subr.mxu0 0.0
  %535 = vmatpush1.xpose.msra.mxu0 0.0
  %536 = vmatprep.subr.mxu0 0.0
  %537 = vmatpush1.xpose.msra.mxu0 0.0
  %538 = vmatprep.subr.mxu0 0.0
  %539 = vmatpush1.xpose.msra.mxu0 0.0
  %540 = vmatprep.subr.mxu0 0.0
  %541 = vmatpush1.xpose.msra.mxu0 0.0
  %542 = vmatprep.mubr.f32.mxu0 %v460
  %543 = vmatmul.mubr.f32.gmra.mrb[0].mxu0 %v459
  %v544 = vpop.f32.mrb[0].mxu0
  %v545 = vadd.f32 %v470, %v544
  %v546 = vpop.f32.mrb[0].mxu0
  %547 = vdwg.mxu0
  %548 = vmatprep.subr.mxu0 %v475
  %549 = vmatpush1.xpose.msra.mxu0 %v464
  %550 = vmatprep.subr.mxu0 0.0
  %551 = vmatpush1.xpose.msra.mxu0 0.0
  %552 = vmatprep.subr.mxu0 0.0
  %553 = vmatpush1.xpose.msra.mxu0 0.0
  %554 = vmatprep.subr.mxu0 0.0
  %555 = vmatpush1.xpose.msra.mxu0 0.0
  %556 = vmatprep.subr.mxu0 0.0
  %557 = vmatpush1.xpose.msra.mxu0 0.0
  %558 = vmatprep.subr.mxu0 0.0
  %559 = vmatpush1.xpose.msra.mxu0 0.0
  %560 = vmatprep.subr.mxu0 0.0
  %561 = vmatpush1.xpose.msra.mxu0 0.0
  %562 = vmatprep.subr.mxu0 0.0
  %563 = vmatpush1.xpose.msra.mxu0 0.0
  %564 = vmatprep.subr.mxu0 0.0
  %565 = vmatpush1.xpose.msra.mxu0 0.0
  %566 = vmatprep.subr.mxu0 0.0
  %567 = vmatpush1.xpose.msra.mxu0 0.0
  %568 = vmatprep.subr.mxu0 0.0
  %569 = vmatpush1.xpose.msra.mxu0 0.0
  %570 = vmatprep.subr.mxu0 0.0
  %571 = vmatpush1.xpose.msra.mxu0 0.0
  %572 = vmatprep.subr.mxu0 0.0
  %573 = vmatpush1.xpose.msra.mxu0 0.0
  %574 = vmatprep.subr.mxu0 0.0
  %575 = vmatpush1.xpose.msra.mxu0 0.0
  %576 = vmatprep.subr.mxu0 0.0
  %577 = vmatpush1.xpose.msra.mxu0 0.0
  %578 = vmatprep.subr.mxu0 0.0
  %579 = vmatpush1.xpose.msra.mxu0 0.0
  %580 = vmatprep.subr.mxu0 0.0
  %581 = vmatpush1.xpose.msra.mxu0 0.0
  %582 = vmatprep.subr.mxu0 0.0
  %583 = vmatpush1.xpose.msra.mxu0 0.0
  %584 = vmatprep.subr.mxu0 0.0
  %585 = vmatpush1.xpose.msra.mxu0 0.0
  %586 = vmatprep.subr.mxu0 0.0
  %587 = vmatpush1.xpose.msra.mxu0 0.0
  %588 = vmatprep.subr.mxu0 0.0
  %589 = vmatpush1.xpose.msra.mxu0 0.0
  %590 = vmatprep.subr.mxu0 0.0
  %591 = vmatpush1.xpose.msra.mxu0 0.0
  %592 = vmatprep.subr.mxu0 0.0
  %593 = vmatpush1.xpose.msra.mxu0 0.0
  %594 = vmatprep.subr.mxu0 0.0
  %595 = vmatpush1.xpose.msra.mxu0 0.0
  %596 = vmatprep.subr.mxu0 0.0
  %597 = vmatpush1.xpose.msra.mxu0 0.0
  %598 = vmatprep.subr.mxu0 0.0
  %599 = vmatpush1.xpose.msra.mxu0 0.0
  %600 = vmatprep.subr.mxu0 0.0
  %601 = vmatpush1.xpose.msra.mxu0 0.0
  %602 = vmatprep.subr.mxu0 0.0
  %603 = vmatpush1.xpose.msra.mxu0 0.0
  %604 = vmatprep.subr.mxu0 0.0
  %605 = vmatpush1.xpose.msra.mxu0 0.0
  %606 = vmatprep.subr.mxu0 0.0
  %607 = vmatpush1.xpose.msra.mxu0 0.0
  %608 = vmatprep.subr.mxu0 0.0
  %609 = vmatpush1.xpose.msra.mxu0 0.0
  %610 = vmatprep.subr.mxu0 0.0
  %611 = vmatpush1.xpose.msra.mxu0 0.0
  %612 = vmatprep.mubr.f32.mxu0 %v462
  %613 = vmatmul.mubr.f32.gmra.mrb[0].mxu0 %v461
  %v614 = vpop.f32.mrb[0].mxu0
  %v615 = vadd.f32 %v545, %v614
  %v616 = vpop.f32.mrb[0].mxu0
  %617 = vdwg.mxu0
  %618 = vst.msk [vmem:[%s6] sm:$0xff] %vm111, %v615
  // Predicated region
  $region26: #{tpu_custom_call.1} parent=0 // pred_check
    _
  $region27: #{tpu_custom_call.1} parent=0 // pred_check_branch
    %620 = sbr.rel (0) target = $region29
  $region28: #{tpu_custom_call.1} parent=0 // pred_region
    _
  $region29: #{tpu_custom_call.1} parent=0 // pred_fallthru
    _
  // Predicated region
  $region30: #{tpu_custom_call.1} parent=0 // pred_check
    _
  $region31: #{tpu_custom_call.1} parent=0 // pred_check_branch
    %622 = sbr.rel (0) target = $region33
  $region32: #{tpu_custom_call.1} parent=0 // pred_region
    _
  $region33: #{tpu_custom_call.1} parent=0 // pred_fallthru
    _

</llo_original>
